<compile_context>
chip_gen: v5e
topology: v5e:2x2
jax: 0.10.0
libtpu: 0.0.40
codegen_flags: <defaults>
</compile_context>

<pallas_src>
import jax
import jax.numpy as jnp
from jax.experimental import pallas as pl
from jax.experimental.pallas import tpu as pltpu

LANE = 128
NEG_BIG = -1.0e30  # finite "minus infinity" for padded action lanes


def mlp_actor_kernel(x_ref, w1_ref, b1_ref, w2_ref, b2_ref, out_ref):
    a = out_ref.shape[-1]  # true (unpadded) action width, static

    # Hidden layer: (tb, F) @ (F, H) + (1, H), then ReLU.  F and H are far
    # below one MXU pass, so no K tiling; whole-block dot.
    x = x_ref[...]
    h = jnp.dot(x, w1_ref[...], preferred_element_type=jnp.float32) + b1_ref[...]
    h = jnp.maximum(h, 0.0)

    # Output layer on the lane-padded action axis: (tb, H) @ (H, A_pad).
    # Padded columns of W2 are zero and their bias is -1e30, so after exp()
    # they contribute exactly 0 to the softmax (no -inf => no NaN risk).
    logits = jnp.dot(h, w2_ref[...], preferred_element_type=jnp.float32) + b2_ref[...]

    # Numerically stable softmax over the padded axis; exact divide so rows
    # sum to 1 up to f32 rounding.
    m = jnp.max(logits, axis=1, keepdims=True)
    e = jnp.exp(logits - m)
    denom = jnp.sum(e, axis=1, keepdims=True)
    probs = e / denom

    # Compact store: only the true A columns leave VMEM.
    out_ref[...] = probs[:, :a].astype(out_ref.dtype)


def prepare_params(w1, b1, w2, b2):
    """One-time parameter prep (hoisted out of the per-call path).

    w1: (F, H); b1: (H,); w2: (H, A); b2: (A,)  -- weights pre-transposed to
    [in, out] so the kernel does plain (B, In) @ (In, Out) MXU matmuls.
    """
    H, A = w2.shape
    A_pad = ((A + LANE - 1) // LANE) * LANE

    w1_f = w1.astype(jnp.float32)
    b1_2d = b1.reshape(1, -1).astype(jnp.float32)
    # Zero-fill padded W2 columns; padded bias lanes get a huge negative value.
    w2_p = jnp.zeros((H, A_pad), jnp.float32).at[:, :A].set(w2.astype(jnp.float32))
    b2_p = (jnp.full((1, A_pad), NEG_BIG, jnp.float32)
            .at[0, :A].set(b2.astype(jnp.float32)))
    return {"w1": w1_f, "b1": b1_2d, "w2": w2_p, "b2": b2_p, "act": A}


def _choose_tile(B, tb):
    tb = min(tb, B)
    # If the whole batch fits in one tile, split in two so the parallel batch
    # axis can shard across both TensorCores on v7x (harmless on v5e/v6e).
    if tb >= B and B >= 16:
        tb = (B + 1) // 2
    tb = max(8, (tb // 8) * 8)  # sublane-aligned
    return tb


def mlp_actor_apply(feat, params, *, tb=4096):
    """feat: (B, F) -> (B, A) action probabilities."""
    B, F = feat.shape
    w1, b1, w2, b2 = params["w1"], params["b1"], params["w2"], params["b2"]
    A = params["act"]
    H, A_pad = w2.shape

    tb = _choose_tile(B, tb)
    n_blocks = pl.cdiv(B, tb)
    B_pad = n_blocks * tb
    if B_pad != B:
        feat_in = jnp.zeros((B_pad, F), feat.dtype).at[:B].set(feat)
    else:
        feat_in = feat  # common case: no extra HBM round trip

    cost = pl.CostEstimate(
        flops=2 * B_pad * (F * H + H * A_pad),
        transcendentals=B_pad * A_pad,
        bytes_accessed=(B_pad * (F + A) + F * H + H + H * A_pad + A_pad) * 4,
    )

    out = pl.pallas_call(
        mlp_actor_kernel,
        out_shape=jax.ShapeDtypeStruct((B_pad, A), jnp.float32),
        grid_spec=pltpu.PrefetchScalarGridSpec(
            num_scalar_prefetch=0,
            grid=(n_blocks,),
            in_specs=[
                pl.BlockSpec((tb, F), lambda i: (i, 0)),      # feat tile
                pl.BlockSpec((F, H), lambda i: (0, 0)),       # W1 (VMEM-resident)
                pl.BlockSpec((1, H), lambda i: (0, 0)),       # b1 (resident)
                pl.BlockSpec((H, A_pad), lambda i: (0, 0)),   # W2 padded (resident)
                pl.BlockSpec((1, A_pad), lambda i: (0, 0)),   # b2 padded (resident)
            ],
            out_specs=pl.BlockSpec((tb, A), lambda i: (i, 0)),  # compact A-wide store
        ),
        compiler_params=pltpu.CompilerParams(
            dimension_semantics=("parallel",)),
        cost_estimate=cost,
    )(feat_in, w1, b1, w2, b2)

    return out[:B] if B_pad != B else out


def mlp_actor(feat, w1, b1, w2, b2, *, tb=4096):
    """Convenience single-shot wrapper (prep + apply)."""
    return mlp_actor_apply(feat, prepare_params(w1, b1, w2, b2), tb=tb)


def reference(feat, w1, b1, w2, b2):
    h = jnp.maximum(feat @ w1 + b1, 0.0)
    logits = h @ w2 + b2
    return jax.nn.softmax(logits, axis=1)


if __name__ == "__main__":
    # Shapes implied by the module (cartpole-ish, kept small).
    B, F, H, A = 8, 4, 32, 2

    key = jax.random.PRNGKey(0)
    k_feat, k_w1, k_b1, k_w2, k_b2 = jax.random.split(key, 5)

    feat = jax.random.normal(k_feat, (B, F), dtype=jnp.float32)
    # Linear weights stored pre-transposed: [in, out].
    w1 = jax.random.normal(k_w1, (F, H), dtype=jnp.float32) * 0.1
    b1 = jax.random.normal(k_b1, (H,), dtype=jnp.float32) * 0.1
    w2 = jax.random.normal(k_w2, (H, A), dtype=jnp.float32) * 0.1
    b2 = jax.random.normal(k_b2, (A,), dtype=jnp.float32) * 0.1

    # One-time parameter prep (hoisted out of the per-call path).
    params = prepare_params(w1, b1, w2, b2)

    # Small case (single grid step).
    out = jax.block_until_ready(mlp_actor_apply(feat, params))
    ref = reference(feat, w1, b1, w2, b2)
    assert out.shape == (B, A)
    assert jnp.allclose(out, ref, atol=1e-3, rtol=1e-3), (out, ref)
    assert jnp.allclose(jnp.sum(out, axis=1), 1.0, atol=1e-3)

    # Larger batch exercises the batch grid (two parallel 512-row tiles).
    B2 = 1024
    feat2 = jax.random.normal(jax.random.PRNGKey(1), (B2, F), dtype=jnp.float32)
    out2 = jax.block_until_ready(mlp_actor_apply(feat2, params))
    ref2 = reference(feat2, w1, b1, w2, b2)
    assert out2.shape == (B2, A)
    assert jnp.allclose(out2, ref2, atol=1e-3, rtol=1e-3)
    assert jnp.allclose(jnp.sum(out2, axis=1), 1.0, atol=1e-3)

    print("KERNEL_OK")
</pallas_src>

<mosaic_0001>
module attributes {stable_mosaic.version = 11 : i64} {
  func.func @mlp_actor_kernel(%arg0: i32, %arg1: memref<8x4xf32, #tpu.memory_space<vmem>>, %arg2: memref<4x32xf32, #tpu.memory_space<vmem>>, %arg3: memref<1x32xf32, #tpu.memory_space<vmem>>, %arg4: memref<32x128xf32, #tpu.memory_space<vmem>>, %arg5: memref<1x128xf32, #tpu.memory_space<vmem>>, %arg6: memref<8x2xf32, #tpu.memory_space<vmem>>) attributes {dimension_semantics = [#tpu.dimension_semantics<parallel>], iteration_bounds = array<i64: 1>, scalar_prefetch = 0 : i64, scratch_operands = 0 : i64, tpu.core_type = #tpu.core_type<tc>, window_params = [{transform_indices = @transform_0, window_bounds = array<i64: 8, 4>}, {pipeline_mode = #tpu.pipeline_mode<synchronous>, transform_indices = @transform_1, window_bounds = array<i64: 4, 32>}, {pipeline_mode = #tpu.pipeline_mode<synchronous>, transform_indices = @transform_2, window_bounds = array<i64: 1, 32>}, {pipeline_mode = #tpu.pipeline_mode<synchronous>, transform_indices = @transform_3, window_bounds = array<i64: 32, 128>}, {pipeline_mode = #tpu.pipeline_mode<synchronous>, transform_indices = @transform_4, window_bounds = array<i64: 1, 128>}, {transform_indices = @transform_5, window_bounds = array<i64: 8, 2>}]} {
    %c0 = arith.constant 0 : index
    %c0_0 = arith.constant 0 : index
    %0 = vector.load %arg1[%c0, %c0_0] : memref<8x4xf32, #tpu.memory_space<vmem>>, vector<8x4xf32>
    %c0_1 = arith.constant 0 : index
    %c0_2 = arith.constant 0 : index
    %1 = vector.load %arg2[%c0_1, %c0_2] : memref<4x32xf32, #tpu.memory_space<vmem>>, vector<4x32xf32>
    %cst = arith.constant dense<0.000000e+00> : vector<8x32xf32>
    %2 = tpu.matmul %0, %1, %cst {dimension_numbers = #tpu.dot_dimension_numbers<[1], [0], [0], [1], [0, 0, 1, 1], [], []>} : vector<8x4xf32>, vector<4x32xf32>, vector<8x32xf32> -> vector<8x32xf32>
    %c0_3 = arith.constant 0 : index
    %c0_4 = arith.constant 0 : index
    %3 = vector.load %arg3[%c0_3, %c0_4] : memref<1x32xf32, #tpu.memory_space<vmem>>, vector<1x32xf32>
    %4 = vector.broadcast %3 : vector<1x32xf32> to vector<8x32xf32>
    %5 = arith.addf %2, %4 : vector<8x32xf32>
    %cst_5 = arith.constant 0.000000e+00 : f32
    %6 = vector.broadcast %cst_5 : f32 to vector<8x32xf32>
    %7 = arith.maximumf %5, %6 : vector<8x32xf32>
    %c0_6 = arith.constant 0 : index
    %c0_7 = arith.constant 0 : index
    %8 = vector.load %arg4[%c0_6, %c0_7] : memref<32x128xf32, #tpu.memory_space<vmem>>, vector<32x128xf32>
    %cst_8 = arith.constant dense<0.000000e+00> : vector<8x128xf32>
    %9 = tpu.matmul %7, %8, %cst_8 {dimension_numbers = #tpu.dot_dimension_numbers<[1], [0], [0], [1], [0, 0, 1, 1], [], []>} : vector<8x32xf32>, vector<32x128xf32>, vector<8x128xf32> -> vector<8x128xf32>
    %c0_9 = arith.constant 0 : index
    %c0_10 = arith.constant 0 : index
    %10 = vector.load %arg5[%c0_9, %c0_10] : memref<1x128xf32, #tpu.memory_space<vmem>>, vector<1x128xf32>
    %11 = vector.broadcast %10 : vector<1x128xf32> to vector<8x128xf32>
    %12 = arith.addf %9, %11 : vector<8x128xf32>
    %cst_11 = arith.constant dense<0xFF800000> : vector<8xf32>
    %13 = vector.multi_reduction <maximumf>, %12, %cst_11 [1] : vector<8x128xf32> to vector<8xf32>
    %14 = vector.shape_cast %13 : vector<8xf32> to vector<8x1xf32>
    %15 = vector.broadcast %14 : vector<8x1xf32> to vector<8x128xf32>
    %16 = arith.subf %12, %15 : vector<8x128xf32>
    %17 = math.exp %16 : vector<8x128xf32>
    %cst_12 = arith.constant dense<0.000000e+00> : vector<8xf32>
    %18 = vector.multi_reduction <add>, %17, %cst_12 [1] : vector<8x128xf32> to vector<8xf32>
    %19 = vector.shape_cast %18 : vector<8xf32> to vector<8x1xf32>
    %20 = vector.broadcast %19 : vector<8x1xf32> to vector<8x128xf32>
    %21 = arith.divf %17, %20 : vector<8x128xf32>
    %22 = vector.extract_strided_slice %21 {offsets = [0, 0], sizes = [8, 2], strides = [1, 1]} : vector<8x128xf32> to vector<8x2xf32>
    %c0_13 = arith.constant 0 : index
    %c0_14 = arith.constant 0 : index
    %23 = vector.load %arg6[%c0_13, %c0_14] : memref<8x2xf32, #tpu.memory_space<vmem>>, vector<8x2xf32>
    tpu.vector_store %arg6[%c0_13, %c0_14], %22 {strides = array<i32>} : memref<8x2xf32, #tpu.memory_space<vmem>>, vector<8x2xf32>,
    return
  }
  func.func @transform_0(%arg0: i32) -> (i32, i32) {
    %c0_i32 = arith.constant 0 : i32
    %c0_i32_0 = arith.constant 0 : i32
    return %arg0, %c0_i32 : i32, i32
  }
  func.func @transform_1(%arg0: i32) -> (i32, i32) {
    %c0_i32 = arith.constant 0 : i32
    %c0_i32_0 = arith.constant 0 : i32
    %c0_i32_1 = arith.constant 0 : i32
    return %c0_i32, %c0_i32_0 : i32, i32
  }
  func.func @transform_2(%arg0: i32) -> (i32, i32) {
    %c0_i32 = arith.constant 0 : i32
    %c0_i32_0 = arith.constant 0 : i32
    %c0_i32_1 = arith.constant 0 : i32
    return %c0_i32, %c0_i32_0 : i32, i32
  }
  func.func @transform_3(%arg0: i32) -> (i32, i32) {
    %c0_i32 = arith.constant 0 : i32
    %c0_i32_0 = arith.constant 0 : i32
    %c0_i32_1 = arith.constant 0 : i32
    return %c0_i32, %c0_i32_0 : i32, i32
  }
  func.func @transform_4(%arg0: i32) -> (i32, i32) {
    %c0_i32 = arith.constant 0 : i32
    %c0_i32_0 = arith.constant 0 : i32
    %c0_i32_1 = arith.constant 0 : i32
    return %c0_i32, %c0_i32_0 : i32, i32
  }
  func.func @transform_5(%arg0: i32) -> (i32, i32) {
    %c0_i32 = arith.constant 0 : i32
    %c0_i32_0 = arith.constant 0 : i32
    return %arg0, %c0_i32 : i32, i32
  }
}

</mosaic_0001>

<llo_original>
// kernel: tpu_custom_call.1
$region0: #{tpu_custom_call.1}
  #allocation0 [shape = 'u32[]', space=smem, size = 0x4, offset = 0x4, fixed_abs, tag = 'smem constant byte address 0x4 - core index']
  #allocation1 [shape = 'u32[72,128]{1,0:T(1,128)}', space=vmem, size = 0x9000, scoped, tag = 'internal scratch']
  %s0 = inlined_call_operand.vmem [shape: f32[8,4], index: 0, kind: input, shape index: {}]
  %s1 = inlined_call_operand.vmem [shape: f32[4,32], index: 1, kind: input, shape index: {}]
  %s2 = inlined_call_operand.vmem [shape: f32[1,32], index: 2, kind: input, shape index: {}]
  %s3 = inlined_call_operand.hbm [shape: f32[32,128], index: 3, kind: input, shape index: {}]
  %s4 = inlined_call_operand.vmem [shape: f32[1,128], index: 4, kind: input, shape index: {}]
  %s5 = inlined_call_operand.vmem [shape: f32[8,2], index: 5, kind: output, shape index: {}]
  %s6 = sld [smem:[#allocation0]]
  $region34: #{tpu_custom_call.1} parent=0
    _
  %s8 = ssub.s32 1, %s6
  %s9 = scalar_select 0, %s8, %s6
  $region1: #{tpu_custom_call.1} parent=0
    #allocation2 [shape = 'u8[16384]{0}', space=vmem, size = 0x4000, scoped, tag = 'input window, operand 3, single buffered']
    #allocation3 [shape = 's32[1]{0}', space=sflag, size = 0x4, scoped, tag = 'scoped memory for tpu_custom_call.1']
    %10 = vsyncpa [#allocation3], 0
    // Predicated region
    $region2: #{tpu_custom_call.1} parent=1 // pred_check
      _
    $region3: #{tpu_custom_call.1} parent=1 // pred_check_branch
      %12 = sbr.rel (0) target = $region5
    $region4: #{tpu_custom_call.1} parent=1 // pred_region
      _
    $region5: #{tpu_custom_call.1} parent=1 // pred_fallthru
      _
    // Predicated region
    $region6: #{tpu_custom_call.1} parent=1 // pred_check
      _
    $region7: #{tpu_custom_call.1} parent=1 // pred_check_branch
      %14 = sbr.rel (0) target = $region9
    $region8: #{tpu_custom_call.1} parent=1 // pred_region
      _
    $region9: #{tpu_custom_call.1} parent=1 // pred_fallthru
      _
    // Predicated region
    $region10: #{tpu_custom_call.1} parent=1 // pred_check
      _
    $region11: #{tpu_custom_call.1} parent=1 // pred_check_branch
      %16 = sbr.rel (0) target = $region13
    $region12: #{tpu_custom_call.1} parent=1 // pred_region
      _
    $region13: #{tpu_custom_call.1} parent=1 // pred_fallthru
      _
    // Predicated region
    $region14: #{tpu_custom_call.1} parent=1 // pred_check
      _
    $region15: #{tpu_custom_call.1} parent=1 // pred_check_branch
      %18 = sbr.rel (0) target = $region17
    $region16: #{tpu_custom_call.1} parent=1 // pred_region
      %20 = vsyncadd [#allocation3], 0
      %s21 = sshll.u32 %s3, 4
      %s22 = int_to_ptr.hbm [resolvable:$true] %s21
      %s23 = sshll.u32 [#allocation2], 4
      %s24 = int_to_ptr.vmem [resolvable:$true] %s23
      %29 = dma.hbm_to_vmem [thread:$0]  %s22, 512, %s24, [#allocation3], 128, 128, 8
    $region17: #{tpu_custom_call.1} parent=1 // pred_fallthru
      _
    // Predicated region
    $region18: #{tpu_custom_call.1} parent=1 // pred_check
      _
    $region19: #{tpu_custom_call.1} parent=1 // pred_check_branch
      %31 = sbr.rel (0) target = $region21
    $region20: #{tpu_custom_call.1} parent=1 // pred_region
      _
    $region21: #{tpu_custom_call.1} parent=1 // pred_fallthru
      _
    // Predicated region
    $region22: #{tpu_custom_call.1} parent=1 // pred_check
      _
    $region23: #{tpu_custom_call.1} parent=1 // pred_check_branch
      %33 = sbr.rel (0) target = $region25
    $region24: #{tpu_custom_call.1} parent=1 // pred_region
      %35 = dma.done [#allocation3], 512
    $region25: #{tpu_custom_call.1} parent=1 // pred_fallthru
      _
    %v36 = vld [vmem:[%s0] sm:$0xff]
    %v37 = vld [vmem:[%s1] sm:$0xf]
    %v38 = vld [vmem:[%s2] sm:$0x1]
    %v40 = vperm.slane %v38, 0
    %vm42 = vcmask 31744
    %v44 = vsel %vm42, %v36, 0
    %vm46 = vcmask 1043456
    %v48 = vsel %vm46, %v37, 0
    %50 = vmatpush.msra.mxu0 0.0
    %51 = vmatpush.msra.mxu0 0.0
    %52 = vmatpush.msra.mxu0 0.0
    %53 = vmatpush.msra.mxu0 0.0
    %54 = vmatpush.msra.mxu0 0.0
    %55 = vmatpush.msra.mxu0 0.0
    %56 = vmatpush.msra.mxu0 0.0
    %57 = vmatpush.msra.mxu0 0.0
    %58 = vmatpush.msra.mxu0 0.0
    %59 = vmatpush.msra.mxu0 0.0
    %60 = vmatpush.msra.mxu0 0.0
    %61 = vmatpush.msra.mxu0 0.0
    %62 = vmatpush.msra.mxu0 0.0
    %63 = vmatpush.msra.mxu0 0.0
    %64 = vmatpush.msra.mxu0 0.0
    %65 = vmatpush.msra.mxu0 %v48
    %66 = vmatmul.f32.gmra.mxu0 %v44
    %v67 = vpop.f32.mrf.mxu0
    %v68 = vadd.f32 %v40, %v67
    %69 = vdwg.mxu0
    %v70 = vmax.f32 %v68, 0.0
    %v71 = vld [vmem:[#allocation2] sm:$0xff]
    %v72 = vld [vmem:[#allocation2 + $0x8] sm:$0xff]
    %v73 = vld [vmem:[#allocation2 + $0x10] sm:$0xff]
    %v74 = vld [vmem:[#allocation2 + $0x18] sm:$0xff]
    %v75 = vld [vmem:[%s4] sm:$0x1]
    %v77 = vperm.slane %v75, 0
    %vm79 = vcmask 261120
    %v81 = vsel %vm79, %v70, 0
    %83 = vmatpush.msra.mxu0 0.0
    %84 = vmatpush.msra.mxu0 0.0
    %85 = vmatpush.msra.mxu0 0.0
    %86 = vmatpush.msra.mxu0 0.0
    %87 = vmatpush.msra.mxu0 0.0
    %88 = vmatpush.msra.mxu0 0.0
    %89 = vmatpush.msra.mxu0 0.0
    %90 = vmatpush.msra.mxu0 0.0
    %91 = vmatpush.msra.mxu0 0.0
    %92 = vmatpush.msra.mxu0 0.0
    %93 = vmatpush.msra.mxu0 0.0
    %94 = vmatpush.msra.mxu0 0.0
    %95 = vmatpush.msra.mxu0 %v74
    %96 = vmatpush.msra.mxu0 %v73
    %97 = vmatpush.msra.mxu0 %v72
    %98 = vmatpush.msra.mxu0 %v71
    %99 = vmatmul.f32.gmra.mxu0 %v81
    %v100 = vpop.f32.mrf.mxu0
    %v101 = vadd.f32 %v77, %v100
    %102 = vdwg.mxu0
    %103 = vmax.xlane.f32.xlu0 %v101
    %v104 = vpop.xlane.xlu0 %103
    %v105 = vsub.f32 %v101, %v104
    %v106 = vmul.f32 %v105, 1.442695
    %v107 = vpow.pop %v106
    %108 = vadd.xlane.f32.xlu0 %v107
    %v109 = vpop.xlane.xlu0 %108
    %v110 = vrcp.pop %v109
    %v111 = vmul.f32 %v109, %v110
    %v112 = vsub.f32 1.0, %v111
    %v113 = vmul.f32 %v110, %v112
    %v114 = vadd.f32 %v110, %v113
    %vm115 = vweird.f32 %v109
    %vm116 = vweird.f32 %v110
    %vm117 = vmor %vm115, %vm116
    %v118 = vsel %vm117, %v110, %v114
    %v119 = vand.u32 2147483647, %v109
    %vm120 = vcmp.eq.f32.partialorder %v119, 8.507059e+37
    %v121 = vand.u32 %v109, 2147483648
    %v122 = vor.u32 1.1754944e-38, %v121
    %v123 = vsel %vm120, %v122, %v118
    %v124 = vmul.f32 %v107, %v123
    %vm125 = vcmask 15360
    %126 = vst.msk [vmem:[%s5] sm:$0xff] %vm125, %v124
    // Predicated region
    $region26: #{tpu_custom_call.1} parent=1 // pred_check
      _
    $region27: #{tpu_custom_call.1} parent=1 // pred_check_branch
      %128 = sbr.rel (0) target = $region29
    $region28: #{tpu_custom_call.1} parent=1 // pred_region
      _
    $region29: #{tpu_custom_call.1} parent=1 // pred_fallthru
      _
    // Predicated region
    $region30: #{tpu_custom_call.1} parent=1 // pred_check
      _
    $region31: #{tpu_custom_call.1} parent=1 // pred_check_branch
      %130 = sbr.rel (0) target = $region33
    $region32: #{tpu_custom_call.1} parent=1 // pred_region
      _
    $region33: #{tpu_custom_call.1} parent=1 // pred_fallthru
      _
    %131 = vsyncpa [#allocation3], 1

</llo_original>
